<compile_context>
chip_gen: v6e
topology: v6e:2x2x1
jax: 0.10.0
libtpu: 0.0.40
codegen_flags: <defaults>
</compile_context>

<pallas_src>
import functools

import jax
import jax.numpy as jnp
from jax.experimental import pallas as pl
from jax.experimental.pallas import tpu as pltpu

ETA = 1e-6        # Constants.eta in the MMVAE / VMLoc codebase
POE_EPS = 1e-8    # eps in ProductOfExperts.forward
VAR_PARAM = 1e-3  # var_param in MVFeature_Ext.infer


def _round_up(x, m):
    return ((x + m - 1) // m) * m


# ----------------------------------------------------------------------------
# Pallas kernels
# ----------------------------------------------------------------------------
def encoder_kernel(HW, THW, L,
                   patches_ref, wc_ref, bc_ref, w12_ref, b12_ref,
                   muvar_ref, acc_ref):
    """One (modality, HW-tile) grid step.

    patches_ref: (1, B, THW, Kpad) bf16      wc_ref:  (1, Kpad, Cfeat) bf16
    bc_ref:      (1, 1, Cfeat)     f32       w12_ref: (1, Cfeat, Wout) bf16
    b12_ref:     (1, 1, Wout)      f32
    muvar_ref:   (1, B, Wout) f32 output — lanes [0,L) = mu, [L,2L) = var
    acc_ref:     (B, Cfeat) f32 scratch — per-batch spatial sum accumulator
    """
    h = pl.program_id(1)

    @pl.when(h == 0)
    def _init():
        acc_ref[...] = jnp.zeros_like(acc_ref)

    B, cfeat = acc_ref.shape

    # conv-as-matmul (bf16 MXU, f32 accumulate) + bias + ReLU  (f32 VPU)
    rows = patches_ref[0].reshape(B * THW, -1)                    # (B*THW, Kpad)
    feat = jnp.dot(rows, wc_ref[0], preferred_element_type=jnp.float32)
    feat = jnp.maximum(feat + bc_ref[0], 0.0)                     # (B*THW, Cfeat)
    feat = feat.reshape(B, THW, cfeat)

    # mask spatial rows beyond HW (zero-padded tail of the last tile):
    # padded rows would otherwise contribute ReLU(bias) to the pooled sum.
    hw_idx = h * THW + jax.lax.broadcasted_iota(jnp.int32, (1, THW, 1), 1)
    feat = jnp.where(hw_idx < HW, feat, 0.0)
    acc_ref[...] += jnp.sum(feat, axis=1)                         # (B, Cfeat)

    @pl.when(h == pl.num_programs(1) - 1)
    def _epilogue():
        pooled = acc_ref[...] * (1.0 / HW)                        # AdaptiveAvgPool2d(1)
        out = jnp.dot(pooled.astype(jnp.bfloat16), w12_ref[0],    # fused fc1|fc2
                      preferred_element_type=jnp.float32) + b12_ref[0]
        # numerically-stable softplus: max(x,0) + log(1 + exp(-|x|))
        sp = jnp.maximum(out, 0.0) + jnp.log(1.0 + jnp.exp(-jnp.abs(out)))
        lane = jax.lax.broadcasted_iota(jnp.int32, out.shape, 1)
        # lanes [0,L): mu ;  lanes [L,..): var = softplus + eta  (lane-dense store)
        muvar_ref[0] = jnp.where(lane < L, out, sp + ETA)


def poe_kernel(mu_ref, var_ref, pd_mu_ref, pd_var_ref):
    """ProductOfExperts over stacked experts (prior first) + var_param scaling.

    mu, var: (E, B, L) f32 — var is softplus(.)+eta directly (prior var = 1),
    so the original exp(log(var)) round trip is avoided.  T = 1/(var+eps).
    """
    t = 1.0 / (var_ref[...] + POE_EPS)
    inv = pl.reciprocal(jnp.sum(t, axis=0), approx=False)         # reused below
    pd_mu_ref[...] = jnp.sum(mu_ref[...] * t, axis=0) * inv
    pd_var_ref[...] = VAR_PARAM * inv


# ----------------------------------------------------------------------------
# pallas_call wrappers
# ----------------------------------------------------------------------------
def encode_modalities(patches, wc, bc, w12, b12, *, HW, THW, L):
    """patches: (E, B, HW_pad, Kpad) bf16 ; weights stacked per modality."""
    E, B, HW_pad, Kpad = patches.shape
    Cfeat = wc.shape[-1]
    Wout = w12.shape[-1]
    n_hw = HW_pad // THW

    kern = functools.partial(encoder_kernel, HW, THW, L)
    return pl.pallas_call(
        kern,
        out_shape=jax.ShapeDtypeStruct((E, B, Wout), jnp.float32),
        grid_spec=pltpu.PrefetchScalarGridSpec(
            num_scalar_prefetch=0,
            grid=(E, n_hw),
            in_specs=[
                pl.BlockSpec((1, B, THW, Kpad), lambda e, h: (e, 0, h, 0)),
                pl.BlockSpec((1, Kpad, Cfeat), lambda e, h: (e, 0, 0)),
                pl.BlockSpec((1, 1, Cfeat), lambda e, h: (e, 0, 0)),
                pl.BlockSpec((1, Cfeat, Wout), lambda e, h: (e, 0, 0)),
                pl.BlockSpec((1, 1, Wout), lambda e, h: (e, 0, 0)),
            ],
            out_specs=pl.BlockSpec((1, B, Wout), lambda e, h: (e, 0, 0)),
            scratch_shapes=[pltpu.VMEM((B, Cfeat), jnp.float32)],
        ),
        compiler_params=pltpu.CompilerParams(
            # modality axis shards across v7x's 2 TensorCores; HW is the reduction.
            dimension_semantics=("parallel", "arbitrary")),
    )(patches, wc, bc, w12, b12)


def product_of_experts(mu_stack, var_stack):
    _, B, L = mu_stack.shape
    vmem = pl.BlockSpec(memory_space=pltpu.MemorySpace.VMEM)
    return pl.pallas_call(
        poe_kernel,
        out_shape=(jax.ShapeDtypeStruct((B, L), jnp.float32),
                   jax.ShapeDtypeStruct((B, L), jnp.float32)),
        in_specs=[vmem, vmem],
        out_specs=(vmem, vmem),
    )(mu_stack, var_stack)


# ----------------------------------------------------------------------------
# Glue: im2col, parameter init, module forward
# ----------------------------------------------------------------------------
def _im2col_3x3(x):
    """x: (B, Cin, H, W) NCHW -> (B, H*W, Cin*9) f32, feature order (cin, ky, kx)."""
    B, C, H, W = x.shape
    xp = jnp.pad(x, ((0, 0), (0, 0), (1, 1), (1, 1)))
    cols = [xp[:, :, ky:ky + H, kx:kx + W] for ky in range(3) for kx in range(3)]
    patches = jnp.stack(cols, axis=2).reshape(B, C * 9, H, W)
    return patches.transpose(0, 2, 3, 1).reshape(B, H * W, C * 9)


def _prep_patches(x, hw_pad, k_pad):
    """im2col + zero-pad HW->hw_pad and K->k_pad, cast to bf16 for the MXU."""
    p = _im2col_3x3(x)
    B, HW, K = p.shape
    p = jnp.pad(p, ((0, 0), (0, hw_pad - HW), (0, k_pad - K)))
    return p.astype(jnp.bfloat16)


def init_params(key, n_latents, c_feat, c_in):
    """Kaiming-normal init for both modalities; weights pre-padded / bf16."""
    k_pad = _round_up(max(c_in * 9, 128), 128)        # contraction dim -> 128
    w_out = _round_up(max(2 * n_latents, 128), 128)   # fused fc output -> lane-dense

    def kaiming(k, shape, fan_in):
        return jax.random.normal(k, shape, jnp.float32) * jnp.sqrt(2.0 / fan_in)

    params = {}
    for mod, k in zip(("image", "depth"), jax.random.split(key, 2)):
        kc, k1, k2 = jax.random.split(k, 3)
        conv_w = kaiming(kc, (c_feat, c_in, 3, 3), c_in * 9)   # stand-in trunk conv
        wc = conv_w.reshape(c_feat, c_in * 9).T                # (Cin*9, Cfeat)
        wc = jnp.pad(wc, ((0, k_pad - c_in * 9), (0, 0))).astype(jnp.bfloat16)
        bc = jnp.zeros((1, c_feat), jnp.float32)
        # nn.Linear weight is (out, in); kernel wants (in, out); bias init = 0
        w1 = kaiming(k1, (n_latents, c_feat), c_feat).T        # (Cfeat, L)
        w2 = kaiming(k2, (n_latents, c_feat), c_feat).T
        w12 = jnp.concatenate([w1, w2], axis=1)                # fused fc1|fc2
        w12 = jnp.pad(w12, ((0, 0), (0, w_out - 2 * n_latents))).astype(jnp.bfloat16)
        b12 = jnp.zeros((1, w_out), jnp.float32)
        params[mod] = dict(wc=wc, bc=bc, w12=w12, b12=b12)
    return params


def mvfeature_ext_forward(params, image=None, depth=None, *, K=1, n_latents=32,
                          tile_hw=128, sample=False, sample_key=None):
    """Mirrors MVFeature_Ext.forward / .infer.

    sample=False = `epoch < opt.train_mean` branch (z = repeat(mu, K));
    sample=True  = qz_x.rsample([K]) with Normal(loc=pd_mu, scale=var_param*pd_var).

    tile_hw sizes the HW block: per step VMEM ~ 2 x (B*THW*Kpad*2B patches,
    double-buffered) + B*THW*Cfeat*4B feat + (B,Cfeat) accumulator.  At real
    sizes (Cfeat=512, ResNet resolution) keep this <= ~24 MiB on v7x (64 MiB
    physical / 32 MiB default-scoped VMEM); v5e/v6e (128 MiB) tolerate ~4x more.
    """
    mods = []
    if image is not None:
        mods.append(("image", image))
    if depth is not None:
        mods.append(("depth", depth))
    assert mods, "at least one of image / depth must be provided"

    B, _, H, W = mods[0][1].shape
    for _, x in mods:
        assert x.shape[0] == B and x.shape[2:] == (H, W), \
            "modalities must share batch and spatial dims"

    HW = H * W
    THW = min(_round_up(tile_hw, 8), _round_up(HW, 8))
    n_hw = pl.cdiv(HW, THW)
    hw_pad = n_hw * THW
    k_pad = params[mods[0][0]]["wc"].shape[0]

    patches = jnp.stack([_prep_patches(x, hw_pad, k_pad) for _, x in mods], axis=0)
    wc = jnp.stack([params[m]["wc"] for m, _ in mods], axis=0)
    bc = jnp.stack([params[m]["bc"] for m, _ in mods], axis=0)
    w12 = jnp.stack([params[m]["w12"] for m, _ in mods], axis=0)
    b12 = jnp.stack([params[m]["b12"] for m, _ in mods], axis=0)

    muvar = encode_modalities(patches, wc, bc, w12, b12,
                              HW=HW, THW=THW, L=n_latents)        # (E, B, Wout)
    mu_enc = muvar[:, :, :n_latents]
    var_enc = muvar[:, :, n_latents:2 * n_latents]                # softplus(.)+eta

    # prior_expert: mu = 0, logvar = log(1) = 0  =>  var = 1
    mu_stack = jnp.concatenate(
        [jnp.zeros((1, B, n_latents), jnp.float32), mu_enc], axis=0)
    var_stack = jnp.concatenate(
        [jnp.ones((1, B, n_latents), jnp.float32), var_enc], axis=0)

    pd_mu, scaled_var = product_of_experts(mu_stack, var_stack)   # qz_x_para

    if sample:
        noise = jax.random.normal(sample_key, (K,) + pd_mu.shape, jnp.float32)
        z = pd_mu[None] + scaled_var[None] * noise                # Normal(mu, scale=var)
    else:
        z = jnp.broadcast_to(pd_mu[None], (K,) + pd_mu.shape)     # repeat(mu, K)
    return z, (pd_mu, scaled_var)


# ----------------------------------------------------------------------------
# Pure-JAX f32 reference (PyTorch math, incl. exp(log(.)) PoE round trip)
# ----------------------------------------------------------------------------
def _reference_forward(params, mods, n_latents):
    B = mods[0][1].shape[0]
    mus = [jnp.zeros((B, n_latents), jnp.float32)]
    logvars = [jnp.zeros((B, n_latents), jnp.float32)]
    for name, x in mods:
        p = params[name]
        Bx, C, H, W = x.shape
        wc = p["wc"].astype(jnp.float32)[:C * 9]
        w12 = p["w12"].astype(jnp.float32)[:, :2 * n_latents]
        b12 = p["b12"][:, :2 * n_latents]
        patches = _im2col_3x3(x).reshape(Bx * H * W, C * 9)
        feat = jnp.maximum(patches @ wc + p["bc"], 0.0)
        pooled = feat.reshape(Bx, H * W, -1).mean(axis=1)
        out = pooled @ w12 + b12
        mus.append(out[:, :n_latents])
        logvars.append(jnp.log(jax.nn.softplus(out[:, n_latents:]) + ETA))
    mu_s, lv_s = jnp.stack(mus, 0), jnp.stack(logvars, 0)
    t = 1.0 / (jnp.exp(lv_s) + POE_EPS)
    pd_mu = jnp.sum(mu_s * t, 0) / jnp.sum(t, 0)
    pd_var = 1.0 / jnp.sum(t, 0)
    return pd_mu, VAR_PARAM * pd_var


# ----------------------------------------------------------------------------
if __name__ == "__main__":
    key = jax.random.PRNGKey(0)
    k_img, k_dep, k_par = jax.random.split(key, 3)

    B, C_in, H, W = 2, 3, 16, 16
    n_latents = 32
    c_feat = 128       # stand-in for ResNet34's fe_out_planes (=512), lane-dense

    image = jax.random.normal(k_img, (B, C_in, H, W), jnp.float32)
    depth = jax.random.normal(k_dep, (B, C_in, H, W), jnp.float32)
    params = init_params(k_par, n_latents, c_feat, C_in)

    z, (mu, var) = mvfeature_ext_forward(params, image, depth, K=2,
                                         n_latents=n_latents, tile_hw=128)
    jax.block_until_ready((z, mu, var))

    assert z.shape == (2, B, n_latents)
    assert mu.shape == (B, n_latents) and var.shape == (B, n_latents)
    assert bool(jnp.all(jnp.isfinite(z)))

    ref_mu, ref_var = _reference_forward(
        params, [("image", image), ("depth", depth)], n_latents)
    assert bool(jnp.allclose(mu, ref_mu, rtol=1e-1, atol=5e-2)), "pd_mu mismatch"
    assert bool(jnp.allclose(var, ref_var, rtol=1.5e-1, atol=1e-6)), "pd_var mismatch"

    print("KERNEL_OK")
</pallas_src>

<mosaic_0001>
module attributes {stable_mosaic.version = 11 : i64} {
  func.func @encoder_kernel(%arg0: i32, %arg1: i32, %arg2: memref<1x2x128x128xbf16, #tpu.memory_space<vmem>>, %arg3: memref<1x128x128xbf16, #tpu.memory_space<vmem>>, %arg4: memref<1x1x128xf32, #tpu.memory_space<vmem>>, %arg5: memref<1x128x128xbf16, #tpu.memory_space<vmem>>, %arg6: memref<1x1x128xf32, #tpu.memory_space<vmem>>, %arg7: memref<1x2x128xf32, #tpu.memory_space<vmem>>, %arg8: memref<2x128xf32, #tpu.memory_space<vmem>>) attributes {dimension_semantics = [#tpu.dimension_semantics<parallel>, #tpu.dimension_semantics<arbitrary>], iteration_bounds = array<i64: 2, 2>, scalar_prefetch = 0 : i64, scratch_operands = 1 : i64, tpu.core_type = #tpu.core_type<tc>, window_params = [{transform_indices = @transform_0, window_bounds = array<i64: 1, 2, 128, 128>}, {transform_indices = @transform_1, window_bounds = array<i64: 1, 128, 128>}, {transform_indices = @transform_2, window_bounds = array<i64: 1, 1, 128>}, {transform_indices = @transform_3, window_bounds = array<i64: 1, 128, 128>}, {transform_indices = @transform_4, window_bounds = array<i64: 1, 1, 128>}, {transform_indices = @transform_5, window_bounds = array<i64: 1, 2, 128>}]} {
    %c0_i32 = arith.constant 0 : i32
    %0 = arith.cmpi eq, %arg1, %c0_i32 : i32
    %1 = arith.extui %0 : i1 to i32
    %c0_i32_0 = arith.constant 0 : i32
    %2 = arith.cmpi ne, %1, %c0_i32_0 : i32
    scf.if %2 {
      %cst_18 = arith.constant 0.000000e+00 : f32
      %33 = vector.broadcast %cst_18 : f32 to vector<2x128xf32>
      %c0_19 = arith.constant 0 : index
      %c0_20 = arith.constant 0 : index
      %34 = vector.load %arg8[%c0_19, %c0_20] : memref<2x128xf32, #tpu.memory_space<vmem>>, vector<2x128xf32>
      tpu.vector_store %arg8[%c0_19, %c0_20], %33 {strides = array<i32>} : memref<2x128xf32, #tpu.memory_space<vmem>>, vector<2x128xf32>,
    } else {
    }
    %c0 = arith.constant 0 : index
    %c0_1 = arith.constant 0 : index
    %c0_2 = arith.constant 0 : index
    %c0_3 = arith.constant 0 : index
    %3 = vector.load %arg2[%c0, %c0_1, %c0_2, %c0_3] : memref<1x2x128x128xbf16, #tpu.memory_space<vmem>>, vector<1x2x128x128xbf16>
    %4 = vector.shape_cast %3 : vector<1x2x128x128xbf16> to vector<2x128x128xbf16>
    %5 = vector.shape_cast %4 : vector<2x128x128xbf16> to vector<256x128xbf16>
    %c0_4 = arith.constant 0 : index
    %c0_5 = arith.constant 0 : index
    %c0_6 = arith.constant 0 : index
    %6 = vector.load %arg3[%c0_4, %c0_5, %c0_6] : memref<1x128x128xbf16, #tpu.memory_space<vmem>>, vector<1x128x128xbf16>
    %7 = vector.shape_cast %6 : vector<1x128x128xbf16> to vector<128x128xbf16>
    %cst = arith.constant dense<0.000000e+00> : vector<256x128xf32>
    %8 = tpu.matmul %5, %7, %cst {dimension_numbers = #tpu.dot_dimension_numbers<[1], [0], [0], [1], [0, 0, 1, 1], [], []>} : vector<256x128xbf16>, vector<128x128xbf16>, vector<256x128xf32> -> vector<256x128xf32>
    %c0_7 = arith.constant 0 : index
    %c0_8 = arith.constant 0 : index
    %c0_9 = arith.constant 0 : index
    %9 = vector.load %arg4[%c0_7, %c0_8, %c0_9] : memref<1x1x128xf32, #tpu.memory_space<vmem>>, vector<1x1x128xf32>
    %10 = vector.shape_cast %9 : vector<1x1x128xf32> to vector<1x128xf32>
    %11 = vector.broadcast %10 : vector<1x128xf32> to vector<256x128xf32>
    %12 = arith.addf %8, %11 : vector<256x128xf32>
    %cst_10 = arith.constant 0.000000e+00 : f32
    %13 = vector.broadcast %cst_10 : f32 to vector<256x128xf32>
    %14 = arith.maximumf %12, %13 : vector<256x128xf32>
    %15 = vector.shape_cast %14 : vector<256x128xf32> to vector<2x128x128xf32>
    %c128_i32 = arith.constant 128 : i32
    %16 = arith.muli %arg1, %c128_i32 : i32
    %17 = tpu.iota {dimensions = array<i32: 1>} : vector<1x128x1xi32>
    %18 = vector.broadcast %16 : i32 to vector<1x128x1xi32>
    %19 = arith.addi %18, %17 : vector<1x128x1xi32>
    %c256_i32 = arith.constant 256 : i32
    %20 = vector.broadcast %c256_i32 : i32 to vector<1x128x1xi32>
    %21 = arith.cmpi slt, %19, %20 : vector<1x128x1xi32>
    %cst_11 = arith.constant 0.000000e+00 : f32
    %22 = vector.shape_cast %21 : vector<1x128x1xi1> to vector<1x128x1xi1>
    %23 = vector.broadcast %22 : vector<1x128x1xi1> to vector<2x128x128xi1>
    %24 = vector.broadcast %cst_11 : f32 to vector<2x128x128xf32>
    %25 = arith.select %23, %15, %24 : vector<2x128x128xi1>, vector<2x128x128xf32>
    %c0_12 = arith.constant 0 : index
    %c0_13 = arith.constant 0 : index
    %26 = vector.load %arg8[%c0_12, %c0_13] : memref<2x128xf32, #tpu.memory_space<vmem>>, vector<2x128xf32>
    %cst_14 = arith.constant dense<0.000000e+00> : vector<2x128xf32>
    %27 = vector.multi_reduction <add>, %25, %cst_14 [1] : vector<2x128x128xf32> to vector<2x128xf32>
    %28 = arith.addf %26, %27 : vector<2x128xf32>
    %c0_15 = arith.constant 0 : index
    %c0_16 = arith.constant 0 : index
    %29 = vector.load %arg8[%c0_15, %c0_16] : memref<2x128xf32, #tpu.memory_space<vmem>>, vector<2x128xf32>
    tpu.vector_store %arg8[%c0_15, %c0_16], %28 {strides = array<i32>} : memref<2x128xf32, #tpu.memory_space<vmem>>, vector<2x128xf32>,
    %c1_i32 = arith.constant 1 : i32
    %30 = arith.cmpi eq, %arg1, %c1_i32 : i32
    %31 = arith.extui %30 : i1 to i32
    %c0_i32_17 = arith.constant 0 : i32
    %32 = arith.cmpi ne, %31, %c0_i32_17 : i32
    scf.if %32 {
      %c0_18 = arith.constant 0 : index
      %c0_19 = arith.constant 0 : index
      %33 = vector.load %arg8[%c0_18, %c0_19] : memref<2x128xf32, #tpu.memory_space<vmem>>, vector<2x128xf32>
      %cst_20 = arith.constant 3.906250e-03 : f32
      %34 = vector.broadcast %cst_20 : f32 to vector<2x128xf32>
      %35 = arith.mulf %33, %34 : vector<2x128xf32>
      %36 = arith.truncf %35 : vector<2x128xf32> to vector<2x128xbf16>
      %c0_21 = arith.constant 0 : index
      %c0_22 = arith.constant 0 : index
      %c0_23 = arith.constant 0 : index
      %37 = vector.load %arg5[%c0_21, %c0_22, %c0_23] : memref<1x128x128xbf16, #tpu.memory_space<vmem>>, vector<1x128x128xbf16>
      %38 = vector.shape_cast %37 : vector<1x128x128xbf16> to vector<128x128xbf16>
      %cst_24 = arith.constant dense<0.000000e+00> : vector<2x128xf32>
      %39 = tpu.matmul %36, %38, %cst_24 {dimension_numbers = #tpu.dot_dimension_numbers<[1], [0], [0], [1], [0, 0, 1, 1], [], []>} : vector<2x128xbf16>, vector<128x128xbf16>, vector<2x128xf32> -> vector<2x128xf32>
      %c0_25 = arith.constant 0 : index
      %c0_26 = arith.constant 0 : index
      %c0_27 = arith.constant 0 : index
      %40 = vector.load %arg6[%c0_25, %c0_26, %c0_27] : memref<1x1x128xf32, #tpu.memory_space<vmem>>, vector<1x1x128xf32>
      %41 = vector.shape_cast %40 : vector<1x1x128xf32> to vector<1x128xf32>
      %42 = vector.broadcast %41 : vector<1x128xf32> to vector<2x128xf32>
      %43 = arith.addf %39, %42 : vector<2x128xf32>
      %cst_28 = arith.constant 0.000000e+00 : f32
      %44 = vector.broadcast %cst_28 : f32 to vector<2x128xf32>
      %45 = arith.maximumf %43, %44 : vector<2x128xf32>
      %46 = math.absf %43 : vector<2x128xf32>
      %cst_29 = arith.constant 0.000000e+00 : f32
      %47 = vector.broadcast %cst_29 : f32 to vector<2x128xf32>
      %48 = arith.subf %47, %46 : vector<2x128xf32>
      %49 = math.exp %48 : vector<2x128xf32>
      %cst_30 = arith.constant 1.000000e+00 : f32
      %50 = vector.broadcast %cst_30 : f32 to vector<2x128xf32>
      %51 = arith.addf %50, %49 : vector<2x128xf32>
      %52 = math.log %51 : vector<2x128xf32>
      %53 = arith.addf %45, %52 : vector<2x128xf32>
      %54 = tpu.iota {dimensions = array<i32: 1>} : vector<2x128xi32>
      %c32_i32 = arith.constant 32 : i32
      %55 = vector.broadcast %c32_i32 : i32 to vector<2x128xi32>
      %56 = arith.cmpi slt, %54, %55 : vector<2x128xi32>
      %cst_31 = arith.constant 9.99999997E-7 : f32
      %57 = vector.broadcast %cst_31 : f32 to vector<2x128xf32>
      %58 = arith.addf %53, %57 : vector<2x128xf32>
      %59 = arith.select %56, %43, %58 : vector<2x128xi1>, vector<2x128xf32>
      %c0_32 = arith.constant 0 : index
      %c0_33 = arith.constant 0 : index
      %c0_34 = arith.constant 0 : index
      %60 = vector.load %arg7[%c0_32, %c0_33, %c0_34] : memref<1x2x128xf32, #tpu.memory_space<vmem>>, vector<1x2x128xf32>
      %61 = vector.shape_cast %60 : vector<1x2x128xf32> to vector<2x128xf32>
      %62 = vector.shape_cast %59 : vector<2x128xf32> to vector<1x2x128xf32>
      tpu.vector_store %arg7[%c0_32, %c0_33, %c0_34], %62 {strides = array<i32>} : memref<1x2x128xf32, #tpu.memory_space<vmem>>, vector<1x2x128xf32>,
    } else {
    }
    return
  }
  func.func @transform_0(%arg0: i32, %arg1: i32) -> (i32, i32, i32, i32) {
    %c0_i32 = arith.constant 0 : i32
    %c0_i32_0 = arith.constant 0 : i32
    %c0_i32_1 = arith.constant 0 : i32
    return %arg0, %c0_i32, %arg1, %c0_i32_0 : i32, i32, i32, i32
  }
  func.func @transform_1(%arg0: i32, %arg1: i32) -> (i32, i32, i32) {
    %c0_i32 = arith.constant 0 : i32
    %c0_i32_0 = arith.constant 0 : i32
    %c0_i32_1 = arith.constant 0 : i32
    return %arg0, %c0_i32, %c0_i32_0 : i32, i32, i32
  }
  func.func @transform_2(%arg0: i32, %arg1: i32) -> (i32, i32, i32) {
    %c0_i32 = arith.constant 0 : i32
    %c0_i32_0 = arith.constant 0 : i32
    %c0_i32_1 = arith.constant 0 : i32
    return %arg0, %c0_i32, %c0_i32_0 : i32, i32, i32
  }
  func.func @transform_3(%arg0: i32, %arg1: i32) -> (i32, i32, i32) {
    %c0_i32 = arith.constant 0 : i32
    %c0_i32_0 = arith.constant 0 : i32
    %c0_i32_1 = arith.constant 0 : i32
    return %arg0, %c0_i32, %c0_i32_0 : i32, i32, i32
  }
  func.func @transform_4(%arg0: i32, %arg1: i32) -> (i32, i32, i32) {
    %c0_i32 = arith.constant 0 : i32
    %c0_i32_0 = arith.constant 0 : i32
    %c0_i32_1 = arith.constant 0 : i32
    return %arg0, %c0_i32, %c0_i32_0 : i32, i32, i32
  }
  func.func @transform_5(%arg0: i32, %arg1: i32) -> (i32, i32, i32) {
    %c0_i32 = arith.constant 0 : i32
    %c0_i32_0 = arith.constant 0 : i32
    %c0_i32_1 = arith.constant 0 : i32
    return %arg0, %c0_i32, %c0_i32_0 : i32, i32, i32
  }
}

</mosaic_0001>

<llo_original>
// kernel: tpu_custom_call.1
$region0: #{tpu_custom_call.1}
  #allocation0 [shape = 'u32[]', space=smem, size = 0x4, offset = 0x4, fixed_abs, tag = 'smem constant byte address 0x4 - core index']
  #allocation1 [shape = 'u32[144,128]{1,0:T(1,128)}', space=vmem, size = 0x12000, scoped, tag = 'internal scratch']
  #allocation2 [shape = 'f32[2,128]{1,0:T(2,128)}', space=vmem, size = 0x400, scoped, tag = 'scratch operand']
  #allocation10 [shape = 's32[]', space=sflag, size = 0x4, offset = 0, fixed_abs, tag = 'sflag constant byte address 0x0 - dummy sync flag']
  %s0 = inlined_call_operand.hbm [shape: bf16[2,2,256,128], index: 0, kind: input, shape index: {}]
  %s1 = inlined_call_operand.hbm [shape: bf16[2,128,128], index: 1, kind: input, shape index: {}]
  %s2 = inlined_call_operand.vmem [shape: f32[2,1,128], index: 2, kind: input, shape index: {}]
  %s3 = inlined_call_operand.hbm [shape: bf16[2,128,128], index: 3, kind: input, shape index: {}]
  %s4 = inlined_call_operand.vmem [shape: f32[2,1,128], index: 4, kind: input, shape index: {}]
  %s5 = inlined_call_operand.hbm [shape: f32[2,2,128], index: 5, kind: output, shape index: {}]
  %s6 = sld [smem:[#allocation0]]
  $region73: #{tpu_custom_call.1} parent=0
    _
  %s8 = ssub.s32 1, %s6
  %s9 = scalar_select 0, %s8, %s6
  $region1: #{tpu_custom_call.1} parent=0
    #allocation3 [shape = 'u8[131072]{0}', space=vmem, size = 0x20000, scoped, tag = 'input window, operand 0']
    #allocation4 [shape = 's32[2]{0}', space=sflag, size = 0x8, scoped, tag = 'scoped memory for tpu_custom_call.1']
    #allocation5 [shape = 's32[2]{0}', space=sflag, size = 0x8, scoped, tag = 'scoped memory for tpu_custom_call.1']
    #allocation6 [shape = 'u8[65536]{0}', space=vmem, size = 0x10000, scoped, tag = 'input window, operand 1']
    #allocation7 [shape = 's32[2]{0}', space=sflag, size = 0x8, scoped, tag = 'scoped memory for tpu_custom_call.1']
    #allocation8 [shape = 'u8[65536]{0}', space=vmem, size = 0x10000, scoped, tag = 'input window, operand 3']
    #allocation9 [shape = 'u8[2048]{0}', space=vmem, size = 0x800, scoped, tag = 'output window, operand 0']
    %10 = vsyncpa [#allocation4], 0
    %s11 = scalar_lea.sflag [#allocation4], 1
    %12 = vsyncpa %s11, 0
    %13 = vsyncpa [#allocation7], 0
    %s14 = scalar_lea.sflag [#allocation7], 1
    %15 = vsyncpa %s14, 0
    %16 = vsyncpa [#allocation5], 0
    %s17 = scalar_lea.sflag [#allocation5], 1
    %18 = vsyncpa %s17, 0
    loop: start=0, step=1, limit=6
    $region2: #{tpu_custom_call.1} parent=1 // loop_pre_header
      _
    $region3: #{tpu_custom_call.1} parent=1 // loop_header
      %s20 = sphi 0, %s24
      %p21 = scmp.ge.s32.totalorder %s20, 6
      %s27 = sphi 0, %s39
      %s28 = sphi 0, %s35
      %s29 = sphi 0, %s27
      %s30 = sphi 0, %s28
      %s31 = sphi 0, %s29
      %s32 = sphi 0, %s30
      %s44 = sphi 0, %s46
      %s47 = sphi 0, %s44
      %s48 = sphi 0, %s47
      %s64 = sphi 0, %s48
      %s70 = sphi 0, %s72
      %s73 = sphi 0, %s70
      %s74 = sphi 0, %s73
      %s90 = sphi 0, %s74
      %s96 = sphi 0, %s98
      %s99 = sphi 0, %s96
      %s100 = sphi 0, %s99
      %s116 = sphi 0, %s100
      %s122 = sphi 0, %s124
      %s125 = sphi 0, %s122
      %s126 = sphi 0, %s125
      %s142 = sphi 0, %s126
      %s148 = sphi 0, %s150
      %s151 = sphi 0, %s148
      %s152 = sphi 0, %s151
      %s168 = sphi 0, %s152
      %s174 = sphi 0, %s176
      %s177 = sphi 0, %s174
      %s178 = sphi 0, %s177
      %s194 = sphi 0, %s178
    $region4: #{tpu_custom_call.1} parent=1 // loop_header_branch
      %23 = sbr.rel (%p21) target = $region8
    $region5: #{tpu_custom_call.1} parent=1 // loop_body
      %s25 = ssub.s32 %s20, 1
      %s26 = ssub.s32 %s20, 2
      %s33 = sadd.s32 1, %s28
      %p34 = scmp.ge.s32.totalorder %s33, 2
      %s35 = scalar_select %p34, 0, %s33
      %s36 = sadd.s32 1, %s27
      %s37 = scalar_select %p34, %s36, %s27
      %p38 = scmp.ge.s32.totalorder %s37, 2
      %s39 = scalar_select %p38, 0, %s37
      %s40 = ssub.s32 %s27, %s39
      %s41 = ssub.s32 %s28, %s35
      %s42 = sor.u32 %s40, %s41
      %p43 = scmp.eq.s32.totalorder %s42, 0
      %s45 = sadd.s32 %s44, 1
      %s46 = scalar_select %p43, %s44, %s45
      %p49 = pneg %p43
      %p50 = scmp.eq.s32.totalorder %s20, 3
      %p51 = por %p49, %p50
      %p52 = scmp.ne.s32.totalorder %s44, %s47
      %p53 = scmp.eq.s32.totalorder %s20, 0
      %p54 = por %p52, %p53
      %p55 = scmp.ne.s32.totalorder %s44, %s47
      %p56 = scmp.eq.s32.totalorder %s25, 3
      %p57 = por %p55, %p56
      %p58 = scmp.ne.s32.totalorder %s47, %s48
      %p59 = scmp.eq.s32.totalorder %s25, 0
      %p60 = por %p58, %p59
      %p61 = scmp.ne.s32.totalorder %s47, %s48
      %p62 = scmp.eq.s32.totalorder %s26, 3
      %p63 = por %p61, %p62
      %p65 = scmp.ne.s32.totalorder %s48, %s64
      %p66 = scmp.eq.s32.totalorder %s26, 0
      %p67 = por %p65, %p66
      %s68 = ssub.s32 %s27, %s39
      %p69 = scmp.eq.s32.totalorder %s68, 0
      %s71 = sadd.s32 %s70, 1
      %s72 = scalar_select %p69, %s70, %s71
      %p75 = pneg %p69
      %p76 = scmp.eq.s32.totalorder %s20, 3
      %p77 = por %p75, %p76
      %p78 = scmp.ne.s32.totalorder %s70, %s73
      %p79 = scmp.eq.s32.totalorder %s20, 0
      %p80 = por %p78, %p79
      %p81 = scmp.ne.s32.totalorder %s70, %s73
      %p82 = scmp.eq.s32.totalorder %s25, 3
      %p83 = por %p81, %p82
      %p84 = scmp.ne.s32.totalorder %s73, %s74
      %p85 = scmp.eq.s32.totalorder %s25, 0
      %p86 = por %p84, %p85
      %p87 = scmp.ne.s32.totalorder %s73, %s74
      %p88 = scmp.eq.s32.totalorder %s26, 3
      %p89 = por %p87, %p88
      %p91 = scmp.ne.s32.totalorder %s74, %s90
      %p92 = scmp.eq.s32.totalorder %s26, 0
      %p93 = por %p91, %p92
      %s94 = ssub.s32 %s27, %s39
      %p95 = scmp.eq.s32.totalorder %s94, 0
      %s97 = sadd.s32 %s96, 1
      %s98 = scalar_select %p95, %s96, %s97
      %p101 = pneg %p95
      %p102 = scmp.eq.s32.totalorder %s20, 3
      %p103 = por %p101, %p102
      %p104 = scmp.ne.s32.totalorder %s96, %s99
      %p105 = scmp.eq.s32.totalorder %s20, 0
      %p106 = por %p104, %p105
      %p107 = scmp.ne.s32.totalorder %s96, %s99
      %p108 = scmp.eq.s32.totalorder %s25, 3
      %p109 = por %p107, %p108
      %p110 = scmp.ne.s32.totalorder %s99, %s100
      %p111 = scmp.eq.s32.totalorder %s25, 0
      %p112 = por %p110, %p111
      %p113 = scmp.ne.s32.totalorder %s99, %s100
      %p114 = scmp.eq.s32.totalorder %s26, 3
      %p115 = por %p113, %p114
      %p117 = scmp.ne.s32.totalorder %s100, %s116
      %p118 = scmp.eq.s32.totalorder %s26, 0
      %p119 = por %p117, %p118
      %s120 = ssub.s32 %s27, %s39
      %p121 = scmp.eq.s32.totalorder %s120, 0
      %s123 = sadd.s32 %s122, 1
      %s124 = scalar_select %p121, %s122, %s123
      %p127 = pneg %p121
      %p128 = scmp.eq.s32.totalorder %s20, 3
      %p129 = por %p127, %p128
      %p130 = scmp.ne.s32.totalorder %s122, %s125
      %p131 = scmp.eq.s32.totalorder %s20, 0
      %p132 = por %p130, %p131
      %p133 = scmp.ne.s32.totalorder %s122, %s125
      %p134 = scmp.eq.s32.totalorder %s25, 3
      %p135 = por %p133, %p134
      %p136 = scmp.ne.s32.totalorder %s125, %s126
      %p137 = scmp.eq.s32.totalorder %s25, 0
      %p138 = por %p136, %p137
      %p139 = scmp.ne.s32.totalorder %s125, %s126
      %p140 = scmp.eq.s32.totalorder %s26, 3
      %p141 = por %p139, %p140
      %p143 = scmp.ne.s32.totalorder %s126, %s142
      %p144 = scmp.eq.s32.totalorder %s26, 0
      %p145 = por %p143, %p144
      %s146 = ssub.s32 %s27, %s39
      %p147 = scmp.eq.s32.totalorder %s146, 0
      %s149 = sadd.s32 %s148, 1
      %s150 = scalar_select %p147, %s148, %s149
      %p153 = pneg %p147
      %p154 = scmp.eq.s32.totalorder %s20, 3
      %p155 = por %p153, %p154
      %p156 = scmp.ne.s32.totalorder %s148, %s151
      %p157 = scmp.eq.s32.totalorder %s20, 0
      %p158 = por %p156, %p157
      %p159 = scmp.ne.s32.totalorder %s148, %s151
      %p160 = scmp.eq.s32.totalorder %s25, 3
      %p161 = por %p159, %p160
      %p162 = scmp.ne.s32.totalorder %s151, %s152
      %p163 = scmp.eq.s32.totalorder %s25, 0
      %p164 = por %p162, %p163
      %p165 = scmp.ne.s32.totalorder %s151, %s152
      %p166 = scmp.eq.s32.totalorder %s26, 3
      %p167 = por %p165, %p166
      %p169 = scmp.ne.s32.totalorder %s152, %s168
      %p170 = scmp.eq.s32.totalorder %s26, 0
      %p171 = por %p169, %p170
      %s172 = ssub.s32 %s27, %s39
      %p173 = scmp.eq.s32.totalorder %s172, 0
      %s175 = sadd.s32 %s174, 1
      %s176 = scalar_select %p173, %s174, %s175
      %p179 = pneg %p173
      %p180 = scmp.eq.s32.totalorder %s20, 3
      %p181 = por %p179, %p180
      %p182 = scmp.ne.s32.totalorder %s174, %s177
      %p183 = scmp.eq.s32.totalorder %s20, 0
      %p184 = por %p182, %p183
      %p185 = scmp.ne.s32.totalorder %s174, %s177
      %p186 = scmp.eq.s32.totalorder %s25, 3
      %p187 = por %p185, %p186
      %p188 = scmp.ne.s32.totalorder %s177, %s178
      %p189 = scmp.eq.s32.totalorder %s25, 0
      %p190 = por %p188, %p189
      %p191 = scmp.ne.s32.totalorder %s177, %s178
      %p192 = scmp.eq.s32.totalorder %s26, 3
      %p193 = por %p191, %p192
      %p195 = scmp.ne.s32.totalorder %s178, %s194
      %p196 = scmp.eq.s32.totalorder %s26, 0
      %p197 = por %p195, %p196
      %p198 = scmp.le.s32.totalorder 1, %s20
      %p199 = scmp.lt.s32.totalorder %s20, 5
      %p200 = pnand %p198, %p199
      %p201 = pneg %p200
      // Predicated region
      $region9: #{tpu_custom_call.1} parent=5 // pred_check
        _
      $region10: #{tpu_custom_call.1} parent=5 // pred_check_branch
        %203 = sbr.rel (%p200) target = $region12
      $region11: #{tpu_custom_call.1} parent=5 // pred_region
        %s204 = ssub.s32 %s20, 1
      $region12: #{tpu_custom_call.1} parent=5 // pred_fallthru
        _
      %p205 = scmp.lt.s32.totalorder %s20, 4
      // Predicated region
      $region13: #{tpu_custom_call.1} parent=5 // pred_check
        %p206 = pneg %p205
      $region14: #{tpu_custom_call.1} parent=5 // pred_check_branch
        %208 = sbr.rel (%p206) target = $region16
      $region15: #{tpu_custom_call.1} parent=5 // pred_region
        // Predicated region
        $region17: #{tpu_custom_call.1} parent=15 // pred_check
          %p209 = pneg %p54
        $region18: #{tpu_custom_call.1} parent=15 // pred_check_branch
          %211 = sbr.rel (%p209) target = $region20
        $region19: #{tpu_custom_call.1} parent=15 // pred_region
          #allocation11 [shape = 'u32[6]{0}', space=smem, size = 0x18, scoped, tag = 'DMA stride descriptor']
          %s212 = sand.u32 %s44, 1
          %s213 = scalar_lea.sflag [#allocation4], %s212
          %s214 = sand.u32 %s44, 1
          %s215 = smul.addr %s214, 128
          %s216 = scalar_lea.vmem [#allocation3], %s215
          %s217 = smul.u32 16, %s28
          %s219 = ssub.s32 2048, 2048
          %220 = vsyncadd %s213, %s219
          %s221 = smul.addr %s27, 64
          %s222 = sadd.s32 %s217, %s221
          %s223 = smul.addr %s222, 64
          %s224 = scalar_lea.hbm %s0, %s223
          %s226 = sshll.u32 1, 14
          %s227 = sxor.u32 4294967295, %s226
          %s229 = sld [smem:[#allocation0]]
          %s230 = sadd.s32 2, %s229
          %s232 = sshll.u32 7, 26
          %s233 = sxor.u32 4294967295, %s232
          %s234 = sand.u32 0, %s233
          %s235 = sshll.u32 %s230, 26
          %s236 = sor.u32 %s234, %s235
          %s237 = sshll.u32 %s216, 4
          %s238 = int_to_ptr.vmem [resolvable:$true] %s237
          %244 = sst [smem:[#allocation11]] 2048
          %s245 = scalar_lea.smem [#allocation11], 1
          %246 = sst [smem:[%s245]] 1024
          %s247 = scalar_lea.smem [#allocation11], 2
          %248 = sst [smem:[%s247]] 16
          %s249 = scalar_lea.smem [#allocation11], 3
          %250 = sst [smem:[%s249]] 64
          %s251 = scalar_lea.smem [#allocation11], 4
          %252 = sst [smem:[%s251]] 64
          %s253 = scalar_lea.smem [#allocation11], 5
          %254 = sst [smem:[%s253]] 4
          %256 = dma.general %s224, 2048, %s238, %s213, 131072, [#allocation11], %s236, 0
        $region20: #{tpu_custom_call.1} parent=15 // pred_fallthru
          _
        // Predicated region
        $region21: #{tpu_custom_call.1} parent=15 // pred_check
          %p257 = pneg %p80
        $region22: #{tpu_custom_call.1} parent=15 // pred_check_branch
          %259 = sbr.rel (%p257) target = $region24
        $region23: #{tpu_custom_call.1} parent=15 // pred_region
          %s260 = sand.u32 %s20, 1
          %s261 = scalar_lea.sflag [#allocation7], %s260
          %s262 = sand.u32 %s70, 1
          %s263 = smul.addr %s262, 64
          %s264 = scalar_lea.vmem [#allocation6], %s263
          %s266 = ssub.s32 1024, 1024
          %267 = vsyncadd %s261, %s266
          %s268 = smul.addr %s27, 16
          %s269 = smul.addr %s268, 64
          %s270 = scalar_lea.hbm %s1, %s269
          %s271 = sshll.u32 %s264, 4
          %s272 = int_to_ptr.vmem [resolvable:$true] %s271
          %277 = dma.hbm_to_vmem [thread:$0]  %s270, 1024, %s272, %s261, 64, 64, 4
        $region24: #{tpu_custom_call.1} parent=15 // pred_fallthru
          _
        // Predicated region
        $region25: #{tpu_custom_call.1} parent=15 // pred_check
          %p278 = pneg %p106
        $region26: #{tpu_custom_call.1} parent=15 // pred_check_branch
          %280 = sbr.rel (%p278) target = $region28
        $region27: #{tpu_custom_call.1} parent=15 // pred_region
          %p281 = scmp.lt.s32.totalorder %s27, 1
          %s282 = scalar_select %p281, %s27, 1
          %s283 = scalar_lea.vmem %s2, %s282
        $region28: #{tpu_custom_call.1} parent=15 // pred_fallthru
          _
        // Predicated region
        $region29: #{tpu_custom_call.1} parent=15 // pred_check
          %p284 = pneg %p132
        $region30: #{tpu_custom_call.1} parent=15 // pred_check_branch
          %286 = sbr.rel (%p284) target = $region32
        $region31: #{tpu_custom_call.1} parent=15 // pred_region
          %s287 = sand.u32 %s20, 1
          %s288 = scalar_lea.sflag [#allocation7], %s287
          %s289 = sand.u32 %s122, 1
          %s290 = smul.addr %s289, 64
          %s291 = scalar_lea.vmem [#allocation8], %s290
          %s293 = ssub.s32 1024, 1024
          %294 = vsyncadd %s288, %s293
          %s295 = smul.addr %s27, 16
          %s296 = smul.addr %s295, 64
          %s297 = scalar_lea.hbm %s3, %s296
          %s298 = sshll.u32 %s291, 4
          %s299 = int_to_ptr.vmem [resolvable:$true] %s298
          %304 = dma.hbm_to_vmem [thread:$0]  %s297, 1024, %s299, %s288, 64, 64, 4
        $region32: #{tpu_custom_call.1} parent=15 // pred_fallthru
          _
        // Predicated region
        $region33: #{tpu_custom_call.1} parent=15 // pred_check
          %p305 = pneg %p158
        $region34: #{tpu_custom_call.1} parent=15 // pred_check_branch
          %307 = sbr.rel (%p305) target = $region36
        $region35: #{tpu_custom_call.1} parent=15 // pred_region
          %p308 = scmp.lt.s32.totalorder %s27, 1
          %s309 = scalar_select %p308, %s27, 1
          %s310 = scalar_lea.vmem %s4, %s309
        $region36: #{tpu_custom_call.1} parent=15 // pred_fallthru
          _
      $region16: #{tpu_custom_call.1} parent=5 // pred_fallthru
        _
      %p311 = scmp.le.s32.totalorder 1, %s20
      %p312 = scmp.lt.s32.totalorder %s20, 5
      %p313 = pnand %p311, %p312
      %p314 = pneg %p313
      // Predicated region
      $region37: #{tpu_custom_call.1} parent=5 // pred_check
        _
      $region38: #{tpu_custom_call.1} parent=5 // pred_check_branch
        %316 = sbr.rel (%p313) target = $region40
      $region39: #{tpu_custom_call.1} parent=5 // pred_region
        %s317 = ssub.s32 %s20, 1
        %s318 = sand.u32 %s47, 1
        %s319 = scalar_lea.sflag [#allocation4], %s318
        %s320 = sand.u32 %s47, 1
        %s321 = smul.addr %s320, 128
        %s322 = scalar_lea.vmem [#allocation3], %s321
        // Predicated region
        $region41: #{tpu_custom_call.1} parent=39 // pred_check
          %p323 = pneg %p60
        $region42: #{tpu_custom_call.1} parent=39 // pred_check_branch
          %325 = sbr.rel (%p323) target = $region44
        $region43: #{tpu_custom_call.1} parent=39 // pred_region
          %326 = dma.done %s319, 2048
        $region44: #{tpu_custom_call.1} parent=39 // pred_fallthru
          _
        %s327 = sand.u32 %s25, 1
        %s328 = scalar_lea.sflag [#allocation7], %s327
        %s329 = sand.u32 %s73, 1
        %s330 = smul.addr %s329, 64
        %s331 = scalar_lea.vmem [#allocation6], %s330
        // Predicated region
        $region45: #{tpu_custom_call.1} parent=39 // pred_check
          %p332 = pneg %p86
        $region46: #{tpu_custom_call.1} parent=39 // pred_check_branch
          %334 = sbr.rel (%p332) target = $region48
        $region47: #{tpu_custom_call.1} parent=39 // pred_region
          %335 = dma.done %s328, 1024
        $region48: #{tpu_custom_call.1} parent=39 // pred_fallthru
          _
        %s336 = sand.u32 %s25, 1
        %s337 = scalar_lea.sflag [#allocation7], %s336
        %s338 = sand.u32 %s125, 1
        %s339 = smul.addr %s338, 64
        %s340 = scalar_lea.vmem [#allocation8], %s339
        // Predicated region
        $region49: #{tpu_custom_call.1} parent=39 // pred_check
          %p341 = pneg %p138
        $region50: #{tpu_custom_call.1} parent=39 // pred_check_branch
          %343 = sbr.rel (%p341) target = $region52
        $region51: #{tpu_custom_call.1} parent=39 // pred_region
          %344 = dma.done %s337, 1024
        $region52: #{tpu_custom_call.1} parent=39 // pred_fallthru
          _
        %s345 = sand.u32 %s47, 1
        %s346 = scalar_lea.sflag [#allocation4], %s345
        %s347 = sand.u32 %s47, 1
        %s348 = smul.addr %s347, 128
        %s349 = scalar_lea.vmem [#allocation3], %s348
        %p350 = pneg %p60
        %p351 = pneg %p57
        %s352 = sand.u32 %s25, 1
        %s353 = scalar_lea.sflag [#allocation7], %s352
        %s354 = sand.u32 %s73, 1
        %s355 = smul.addr %s354, 64
        %s356 = scalar_lea.vmem [#allocation6], %s355
        %p357 = pneg %p86
        %p358 = pneg %p83
        %p359 = scmp.lt.s32.totalorder %s29, 1
        %s360 = scalar_select %p359, %s29, 1
        %s361 = scalar_lea.vmem %s2, %s360
        %p362 = pneg %p112
        %p363 = pneg %p109
        %s364 = sand.u32 %s25, 1
        %s365 = scalar_lea.sflag [#allocation7], %s364
        %s366 = sand.u32 %s125, 1
        %s367 = smul.addr %s366, 64
        %s368 = scalar_lea.vmem [#allocation8], %s367
        %p369 = pneg %p138
        %p370 = pneg %p135
        %p371 = scmp.lt.s32.totalorder %s29, 1
        %s372 = scalar_select %p371, %s29, 1
        %s373 = scalar_lea.vmem %s4, %s372
        %p374 = pneg %p164
        %p375 = pneg %p161
        %p376 = pneg %p190
        %p377 = pneg %p187
        %s378 = sand.u32 %s177, 1
        %s379 = scalar_lea.sflag [#allocation5], %s378
        %s380 = sand.u32 %s177, 1
        %s381 = smul.addr %s380, 2
        %s382 = scalar_lea.vmem [#allocation9], %s381
        %s383 = smul.u32 16, %s30
        %p384 = scmp.lt.s32.totalorder %s29, 1
        %s385 = scalar_select %p384, %s29, 1
        %s386 = scalar_lea.vmem %s2, %s385
        %p387 = scmp.lt.s32.totalorder %s29, 1
        %s388 = scalar_select %p387, %s29, 1
        %s389 = scalar_lea.vmem %s4, %s388
        %p391 = scmp.eq.s32.totalorder %s30, 0
        // Predicated region
        $region53: #{tpu_custom_call.1} parent=39 // pred_check
          %p392 = pneg %p391
        $region54: #{tpu_custom_call.1} parent=39 // pred_check_branch
          %394 = sbr.rel (%p392) target = $region56
        $region55: #{tpu_custom_call.1} parent=39 // pred_region
          %395 = vst [vmem:[#allocation2] sm:$0x3] 0.0
        $region56: #{tpu_custom_call.1} parent=39 // pred_fallthru
          _
        %v396 = vld [vmem:[%s322] sm:$0xf]
        %v397 = vld [vmem:[%s322 + $0x4] sm:$0xf]
        %v398 = vld [vmem:[%s322 + $0x8] sm:$0xf]
        %v399 = vld [vmem:[%s322 + $0xc] sm:$0xf]
        %v400 = vld [vmem:[%s322 + $0x10] sm:$0xf]
        %v401 = vld [vmem:[%s322 + $0x14] sm:$0xf]
        %v402 = vld [vmem:[%s322 + $0x18] sm:$0xf]
        %v403 = vld [vmem:[%s322 + $0x1c] sm:$0xf]
        %v404 = vld [vmem:[%s322 + $0x20] sm:$0xf]
        %v405 = vld [vmem:[%s322 + $0x24] sm:$0xf]
        %v406 = vld [vmem:[%s322 + $0x28] sm:$0xf]
        %v407 = vld [vmem:[%s322 + $0x2c] sm:$0xf]
        %v408 = vld [vmem:[%s322 + $0x30] sm:$0xf]
        %v409 = vld [vmem:[%s322 + $0x34] sm:$0xf]
        %v410 = vld [vmem:[%s322 + $0x38] sm:$0xf]
        %v411 = vld [vmem:[%s322 + $0x3c] sm:$0xf]
        %v412 = vld [vmem:[%s322 + $0x40] sm:$0xf]
        %v413 = vld [vmem:[%s322 + $0x44] sm:$0xf]
        %v414 = vld [vmem:[%s322 + $0x48] sm:$0xf]
        %v415 = vld [vmem:[%s322 + $0x4c] sm:$0xf]
        %v416 = vld [vmem:[%s322 + $0x50] sm:$0xf]
        %v417 = vld [vmem:[%s322 + $0x54] sm:$0xf]
        %v418 = vld [vmem:[%s322 + $0x58] sm:$0xf]
        %v419 = vld [vmem:[%s322 + $0x5c] sm:$0xf]
        %v420 = vld [vmem:[%s322 + $0x60] sm:$0xf]
        %v421 = vld [vmem:[%s322 + $0x64] sm:$0xf]
        %v422 = vld [vmem:[%s322 + $0x68] sm:$0xf]
        %v423 = vld [vmem:[%s322 + $0x6c] sm:$0xf]
        %v424 = vld [vmem:[%s322 + $0x70] sm:$0xf]
        %v425 = vld [vmem:[%s322 + $0x74] sm:$0xf]
        %v426 = vld [vmem:[%s322 + $0x78] sm:$0xf]
        %v427 = vld [vmem:[%s322 + $0x7c] sm:$0xf]
        %v428 = vld [vmem:[%s331] sm:$0xf]
        %v429 = vld [vmem:[%s331 + $0x4] sm:$0xf]
        %v430 = vld [vmem:[%s331 + $0x8] sm:$0xf]
        %v431 = vld [vmem:[%s331 + $0xc] sm:$0xf]
        %v432 = vld [vmem:[%s331 + $0x10] sm:$0xf]
        %v433 = vld [vmem:[%s331 + $0x14] sm:$0xf]
        %v434 = vld [vmem:[%s331 + $0x18] sm:$0xf]
        %v435 = vld [vmem:[%s331 + $0x1c] sm:$0xf]
        %v436 = vld [vmem:[%s331 + $0x20] sm:$0xf]
        %v437 = vld [vmem:[%s331 + $0x24] sm:$0xf]
        %v438 = vld [vmem:[%s331 + $0x28] sm:$0xf]
        %v439 = vld [vmem:[%s331 + $0x2c] sm:$0xf]
        %v440 = vld [vmem:[%s331 + $0x30] sm:$0xf]
        %v441 = vld [vmem:[%s331 + $0x34] sm:$0xf]
        %v442 = vld [vmem:[%s331 + $0x38] sm:$0xf]
        %v443 = vld [vmem:[%s331 + $0x3c] sm:$0xf]
        %v444 = vld [vmem:[%s386] sm:$0x1]
        %v446 = vlaneseq
        %v447 = vshrl.u32 %v446, 7
        %v448 = vsub.s32 0, %v447
        %v449 = vrot.slane %v444, %v448
        %v483 = vunpack.c.l.b16 %v396
        %v484 = vunpack.c.l.b16 %v397
        %v485 = vunpack.c.l.b16 %v398
        %v486 = vunpack.c.l.b16 %v399
        %v487 = vunpack.c.l.b16 %v400
        %v488 = vunpack.c.l.b16 %v401
        %v489 = vunpack.c.l.b16 %v402
        %v490 = vunpack.c.l.b16 %v403
        %v491 = vunpack.c.l.b16 %v404
        %v492 = vunpack.c.l.b16 %v405
        %v493 = vunpack.c.l.b16 %v406
        %v494 = vunpack.c.l.b16 %v407
        %v495 = vunpack.c.l.b16 %v408
        %v496 = vunpack.c.l.b16 %v409
        %v497 = vunpack.c.l.b16 %v410
        %v498 = vunpack.c.l.b16 %v411
        %v499 = vunpack.c.l.b16 %v412
        %v500 = vunpack.c.l.b16 %v413
        %v501 = vunpack.c.l.b16 %v414
        %v502 = vunpack.c.l.b16 %v415
        %v503 = vunpack.c.l.b16 %v416
        %v504 = vunpack.c.l.b16 %v417
        %v505 = vunpack.c.l.b16 %v418
        %v506 = vunpack.c.l.b16 %v419
        %v507 = vunpack.c.l.b16 %v420
        %v508 = vunpack.c.l.b16 %v421
        %v509 = vunpack.c.l.b16 %v422
        %v510 = vunpack.c.l.b16 %v423
        %v511 = vunpack.c.l.b16 %v424
        %v512 = vunpack.c.l.b16 %v425
        %v513 = vunpack.c.l.b16 %v426
        %v514 = vunpack.c.l.b16 %v427
        %v515 = vpack.c.b16 %v484, %v483
        %v516 = vpack.c.b16 %v486, %v485
        %v517 = vpack.c.b16 %v488, %v487
        %v518 = vpack.c.b16 %v490, %v489
        %v519 = vpack.c.b16 %v492, %v491
        %v520 = vpack.c.b16 %v494, %v493
        %v521 = vpack.c.b16 %v496, %v495
        %v522 = vpack.c.b16 %v498, %v497
        %v523 = vpack.c.b16 %v500, %v499
        %v524 = vpack.c.b16 %v502, %v501
        %v525 = vpack.c.b16 %v504, %v503
        %v526 = vpack.c.b16 %v506, %v505
        %v527 = vpack.c.b16 %v508, %v507
        %v528 = vpack.c.b16 %v510, %v509
        %v529 = vpack.c.b16 %v512, %v511
        %v530 = vpack.c.b16 %v514, %v513
        %v563 = vunpack.c.l.b16 %v428
        %v564 = vunpack.c.l.b16 %v429
        %v565 = vunpack.c.l.b16 %v430
        %v566 = vunpack.c.l.b16 %v431
        %v567 = vunpack.c.l.b16 %v432
        %v568 = vunpack.c.l.b16 %v433
        %v569 = vunpack.c.l.b16 %v434
        %v570 = vunpack.c.l.b16 %v435
        %v571 = vunpack.c.l.b16 %v436
        %v572 = vunpack.c.l.b16 %v437
        %v573 = vunpack.c.l.b16 %v438
        %v574 = vunpack.c.l.b16 %v439
        %v575 = vunpack.c.l.b16 %v440
        %v576 = vunpack.c.l.b16 %v441
        %v577 = vunpack.c.l.b16 %v442
        %v578 = vunpack.c.l.b16 %v443
        %v579 = vpack.c.b16 %v564, %v563
        %v580 = vpack.c.b16 %v566, %v565
        %v581 = vpack.c.b16 %v568, %v567
        %v582 = vpack.c.b16 %v570, %v569
        %v583 = vpack.c.b16 %v572, %v571
        %v584 = vpack.c.b16 %v574, %v573
        %v585 = vpack.c.b16 %v576, %v575
        %v586 = vpack.c.b16 %v578, %v577
        %595 = vmatprep.subr.bf16.mxu0 0
        %596 = vmatpush1.bf16.msra.mxu0 %v586
        %597 = vmatprep.subr.bf16.mxu0 0
        %598 = vmatpush1.bf16.msra.mxu0 %v585
        %599 = vmatprep.subr.bf16.mxu0 0
        %600 = vmatpush1.bf16.msra.mxu0 %v584
        %601 = vmatprep.subr.bf16.mxu0 0
        %602 = vmatpush1.bf16.msra.mxu0 %v583
        %603 = vmatprep.subr.bf16.mxu0 0
        %604 = vmatpush1.bf16.msra.mxu0 %v582
        %605 = vmatprep.subr.bf16.mxu0 0
        %606 = vmatpush1.bf16.msra.mxu0 %v581
        %607 = vmatprep.subr.bf16.mxu0 0
        %608 = vmatpush1.bf16.msra.mxu0 %v580
        %609 = vmatprep.subr.bf16.mxu0 0
        %610 = vmatpush1.bf16.msra.mxu0 %v579
        %611 = vmatprep.subr.bf16.mxu0 0
        %612 = vmatpush2.bf16.msra.mxu0 0
        %613 = vmatprep.subr.bf16.mxu0 0
        %614 = vmatpush2.bf16.msra.mxu0 0
        %615 = vmatprep.subr.bf16.mxu0 0
        %616 = vmatpush2.bf16.msra.mxu0 0
        %617 = vmatprep.subr.bf16.mxu0 0
        %618 = vmatpush2.bf16.msra.mxu0 0
        %619 = vmatprep.subr.bf16.mxu0 0
        %620 = vmatpush2.bf16.msra.mxu0 0
        %621 = vmatprep.subr.bf16.mxu0 0
        %622 = vmatpush2.bf16.msra.mxu0 0
        %623 = vmatprep.subr.bf16.mxu0 0
        %624 = vmatpush2.bf16.msra.mxu0 0
        %625 = vmatprep.subr.bf16.mxu0 0
        %626 = vmatpush2.bf16.msra.mxu0 0
        %627 = vmatprep.mubr.bf16.mxu0 0
        %628 = vmatmul.mubr.bf16.gmra.mxu0 %v515
        %v629 = vpop.f32.mrf.mxu0
        %v630 = vadd.f32 %v449, %v629
        %v631 = vpop.f32.mrf.mxu0
        %v632 = vpop.f32.mrf.mxu0
        %v633 = vadd.f32 %v449, %v632
        %v634 = vpop.f32.mrf.mxu0
        %635 = vmatprep.mubr.bf16.mxu0 0
        %636 = vmatmul.mubr.bf16.gmra.mxu0 %v516
        %v637 = vpop.f32.mrf.mxu0
        %v638 = vadd.f32 %v449, %v637
        %v639 = vpop.f32.mrf.mxu0
        %v640 = vpop.f32.mrf.mxu0
        %v641 = vadd.f32 %v449, %v640
        %v642 = vpop.f32.mrf.mxu0
        %643 = vmatprep.mubr.bf16.mxu0 0
        %644 = vmatmul.mubr.bf16.gmra.mxu0 %v517
        %v645 = vpop.f32.mrf.mxu0
        %v646 = vadd.f32 %v449, %v645
        %v647 = vpop.f32.mrf.mxu0
        %v648 = vpop.f32.mrf.mxu0
        %v649 = vadd.f32 %v449, %v648
        %v650 = vpop.f32.mrf.mxu0
        %651 = vmatprep.mubr.bf16.mxu0 0
        %652 = vmatmul.mubr.bf16.gmra.mxu0 %v518
        %v653 = vpop.f32.mrf.mxu0
        %v654 = vadd.f32 %v449, %v653
        %v655 = vpop.f32.mrf.mxu0
        %v656 = vpop.f32.mrf.mxu0
        %v657 = vadd.f32 %v449, %v656
        %v658 = vpop.f32.mrf.mxu0
        %659 = vmatprep.mubr.bf16.mxu0 0
        %660 = vmatmul.mubr.bf16.gmra.mxu0 %v519
        %v661 = vpop.f32.mrf.mxu0
        %v662 = vadd.f32 %v449, %v661
        %v663 = vpop.f32.mrf.mxu0
        %v664 = vpop.f32.mrf.mxu0
        %v665 = vadd.f32 %v449, %v664
        %v666 = vpop.f32.mrf.mxu0
        %667 = vmatprep.mubr.bf16.mxu0 0
        %668 = vmatmul.mubr.bf16.gmra.mxu0 %v520
        %v669 = vpop.f32.mrf.mxu0
        %v670 = vadd.f32 %v449, %v669
        %v671 = vpop.f32.mrf.mxu0
        %v672 = vpop.f32.mrf.mxu0
        %v673 = vadd.f32 %v449, %v672
        %v674 = vpop.f32.mrf.mxu0
        %675 = vmatprep.mubr.bf16.mxu0 0
        %676 = vmatmul.mubr.bf16.gmra.mxu0 %v521
        %v677 = vpop.f32.mrf.mxu0
        %v678 = vadd.f32 %v449, %v677
        %v679 = vpop.f32.mrf.mxu0
        %v680 = vpop.f32.mrf.mxu0
        %v681 = vadd.f32 %v449, %v680
        %v682 = vpop.f32.mrf.mxu0
        %683 = vmatprep.mubr.bf16.mxu0 0
        %684 = vmatmul.mubr.bf16.gmra.mxu0 %v522
        %v685 = vpop.f32.mrf.mxu0
        %v686 = vadd.f32 %v449, %v685
        %v687 = vpop.f32.mrf.mxu0
        %v688 = vpop.f32.mrf.mxu0
        %v689 = vadd.f32 %v449, %v688
        %v690 = vpop.f32.mrf.mxu0
        %691 = vmatprep.mubr.bf16.mxu0 0
        %692 = vmatmul.mubr.bf16.gmra.mxu0 %v523
        %v693 = vpop.f32.mrf.mxu0
        %v694 = vadd.f32 %v449, %v693
        %v695 = vpop.f32.mrf.mxu0
        %v696 = vpop.f32.mrf.mxu0
        %v697 = vadd.f32 %v449, %v696
        %v698 = vpop.f32.mrf.mxu0
        %699 = vmatprep.mubr.bf16.mxu0 0
        %700 = vmatmul.mubr.bf16.gmra.mxu0 %v524
        %v701 = vpop.f32.mrf.mxu0
        %v702 = vadd.f32 %v449, %v701
        %v703 = vpop.f32.mrf.mxu0
        %v704 = vpop.f32.mrf.mxu0
        %v705 = vadd.f32 %v449, %v704
        %v706 = vpop.f32.mrf.mxu0
        %707 = vmatprep.mubr.bf16.mxu0 0
        %708 = vmatmul.mubr.bf16.gmra.mxu0 %v525
        %v709 = vpop.f32.mrf.mxu0
        %v710 = vadd.f32 %v449, %v709
        %v711 = vpop.f32.mrf.mxu0
        %v712 = vpop.f32.mrf.mxu0
        %v713 = vadd.f32 %v449, %v712
        %v714 = vpop.f32.mrf.mxu0
        %715 = vmatprep.mubr.bf16.mxu0 0
        %716 = vmatmul.mubr.bf16.gmra.mxu0 %v526
        %v717 = vpop.f32.mrf.mxu0
        %v718 = vadd.f32 %v449, %v717
        %v719 = vpop.f32.mrf.mxu0
        %v720 = vpop.f32.mrf.mxu0
        %v721 = vadd.f32 %v449, %v720
        %v722 = vpop.f32.mrf.mxu0
        %723 = vmatprep.mubr.bf16.mxu0 0
        %724 = vmatmul.mubr.bf16.gmra.mxu0 %v527
        %v725 = vpop.f32.mrf.mxu0
        %v726 = vadd.f32 %v449, %v725
        %v727 = vpop.f32.mrf.mxu0
        %v728 = vpop.f32.mrf.mxu0
        %v729 = vadd.f32 %v449, %v728
        %v730 = vpop.f32.mrf.mxu0
        %731 = vmatprep.mubr.bf16.mxu0 0
        %732 = vmatmul.mubr.bf16.gmra.mxu0 %v528
        %v733 = vpop.f32.mrf.mxu0
        %v734 = vadd.f32 %v449, %v733
        %v735 = vpop.f32.mrf.mxu0
        %v736 = vpop.f32.mrf.mxu0
        %v737 = vadd.f32 %v449, %v736
        %v738 = vpop.f32.mrf.mxu0
        %739 = vmatprep.mubr.bf16.mxu0 0
        %740 = vmatmul.mubr.bf16.gmra.mxu0 %v529
        %v741 = vpop.f32.mrf.mxu0
        %v742 = vadd.f32 %v449, %v741
        %v743 = vpop.f32.mrf.mxu0
        %v744 = vpop.f32.mrf.mxu0
        %v745 = vadd.f32 %v449, %v744
        %v746 = vpop.f32.mrf.mxu0
        %747 = vmatprep.mubr.bf16.mxu0 0
        %748 = vmatmul.mubr.bf16.gmra.mxu0 %v530
        %v749 = vpop.f32.mrf.mxu0
        %v750 = vadd.f32 %v449, %v749
        %v751 = vpop.f32.mrf.mxu0
        %v752 = vpop.f32.mrf.mxu0
        %v753 = vadd.f32 %v449, %v752
        %v754 = vpop.f32.mrf.mxu0
        %755 = vdwg.mxu0
        %v756 = vmax.f32 %v630, 0.0
        %v757 = vmax.f32 %v633, 0.0
        %v758 = vmax.f32 %v638, 0.0
        %v759 = vmax.f32 %v641, 0.0
        %v760 = vmax.f32 %v646, 0.0
        %v761 = vmax.f32 %v649, 0.0
        %v762 = vmax.f32 %v654, 0.0
        %v763 = vmax.f32 %v657, 0.0
        %v764 = vmax.f32 %v662, 0.0
        %v765 = vmax.f32 %v665, 0.0
        %v766 = vmax.f32 %v670, 0.0
        %v767 = vmax.f32 %v673, 0.0
        %v768 = vmax.f32 %v678, 0.0
        %v769 = vmax.f32 %v681, 0.0
        %v770 = vmax.f32 %v686, 0.0
        %v771 = vmax.f32 %v689, 0.0
        %v772 = vmax.f32 %v694, 0.0
        %v773 = vmax.f32 %v697, 0.0
        %v774 = vmax.f32 %v702, 0.0
        %v775 = vmax.f32 %v705, 0.0
        %v776 = vmax.f32 %v710, 0.0
        %v777 = vmax.f32 %v713, 0.0
        %v778 = vmax.f32 %v718, 0.0
        %v779 = vmax.f32 %v721, 0.0
        %v780 = vmax.f32 %v726, 0.0
        %v781 = vmax.f32 %v729, 0.0
        %v782 = vmax.f32 %v734, 0.0
        %v783 = vmax.f32 %v737, 0.0
        %v784 = vmax.f32 %v742, 0.0
        %v785 = vmax.f32 %v745, 0.0
        %v786 = vmax.f32 %v750, 0.0
        %v787 = vmax.f32 %v753, 0.0
        %s788 = smul.u32 %s30, 128
        %v789 = vlaneseq
        %v790 = vshrl.u32 %v789, 7
        %v791 = vadd.s32 %v790, 8
        %v792 = vadd.s32 %v790, 16
        %v793 = vadd.s32 %v790, 24
        %v794 = vadd.s32 %v790, 32
        %v795 = vadd.s32 %v790, 40
        %v796 = vadd.s32 %v790, 48
        %v797 = vadd.s32 %v790, 56
        %v798 = vadd.s32 %v790, 64
        %v799 = vadd.s32 %v790, 72
        %v800 = vadd.s32 %v790, 80
        %v801 = vadd.s32 %v790, 88
        %v802 = vadd.s32 %v790, 96
        %v803 = vadd.s32 %v790, 104
        %v804 = vadd.s32 %v790, 112
        %v805 = vadd.s32 %v790, 120
        %v806 = vstv %s788
        %v807 = vadd.s32 %v806, %v790
        %v808 = vadd.s32 %v806, %v791
        %v809 = vadd.s32 %v806, %v792
        %v810 = vadd.s32 %v806, %v793
        %v811 = vadd.s32 %v806, %v794
        %v812 = vadd.s32 %v806, %v795
        %v813 = vadd.s32 %v806, %v796
        %v814 = vadd.s32 %v806, %v797
        %v815 = vadd.s32 %v806, %v798
        %v816 = vadd.s32 %v806, %v799
        %v817 = vadd.s32 %v806, %v800
        %v818 = vadd.s32 %v806, %v801
        %v819 = vadd.s32 %v806, %v802
        %v820 = vadd.s32 %v806, %v803
        %v821 = vadd.s32 %v806, %v804
        %v822 = vadd.s32 %v806, %v805
        %vm823 = vcmp.lt.s32.totalorder %v807, 256
        %vm824 = vcmp.lt.s32.totalorder %v808, 256
        %vm825 = vcmp.lt.s32.totalorder %v809, 256
        %vm826 = vcmp.lt.s32.totalorder %v810, 256
        %vm827 = vcmp.lt.s32.totalorder %v811, 256
        %vm828 = vcmp.lt.s32.totalorder %v812, 256
        %vm829 = vcmp.lt.s32.totalorder %v813, 256
        %vm830 = vcmp.lt.s32.totalorder %v814, 256
        %vm831 = vcmp.lt.s32.totalorder %v815, 256
        %vm832 = vcmp.lt.s32.totalorder %v816, 256
        %vm833 = vcmp.lt.s32.totalorder %v817, 256
        %vm834 = vcmp.lt.s32.totalorder %v818, 256
        %vm835 = vcmp.lt.s32.totalorder %v819, 256
        %vm836 = vcmp.lt.s32.totalorder %v820, 256
        %vm837 = vcmp.lt.s32.totalorder %v821, 256
        %vm838 = vcmp.lt.s32.totalorder %v822, 256
        %v839 = vsel %vm823, 1, 0
        %v840 = vsel %vm824, 1, 0
        %v841 = vsel %vm825, 1, 0
        %v842 = vsel %vm826, 1, 0
        %v843 = vsel %vm827, 1, 0
        %v844 = vsel %vm828, 1, 0
        %v845 = vsel %vm829, 1, 0
        %v846 = vsel %vm830, 1, 0
        %v847 = vsel %vm831, 1, 0
        %v848 = vsel %vm832, 1, 0
        %v849 = vsel %vm833, 1, 0
        %v850 = vsel %vm834, 1, 0
        %v851 = vsel %vm835, 1, 0
        %v852 = vsel %vm836, 1, 0
        %v853 = vsel %vm837, 1, 0
        %v854 = vsel %vm838, 1, 0
        %vm855 = vcmp.eq.s32.totalorder %v839, 1
        %vm856 = vcmp.eq.s32.totalorder %v840, 1
        %vm857 = vcmp.eq.s32.totalorder %v841, 1
        %vm858 = vcmp.eq.s32.totalorder %v842, 1
        %vm859 = vcmp.eq.s32.totalorder %v843, 1
        %vm860 = vcmp.eq.s32.totalorder %v844, 1
        %vm861 = vcmp.eq.s32.totalorder %v845, 1
        %vm862 = vcmp.eq.s32.totalorder %v846, 1
        %vm863 = vcmp.eq.s32.totalorder %v847, 1
        %vm864 = vcmp.eq.s32.totalorder %v848, 1
        %vm865 = vcmp.eq.s32.totalorder %v849, 1
        %vm866 = vcmp.eq.s32.totalorder %v850, 1
        %vm867 = vcmp.eq.s32.totalorder %v851, 1
        %vm868 = vcmp.eq.s32.totalorder %v852, 1
        %vm869 = vcmp.eq.s32.totalorder %v853, 1
        %vm870 = vcmp.eq.s32.totalorder %v854, 1
        %v871 = vsel %vm855, %v756, 0.0
        %v872 = vsel %vm856, %v757, 0.0
        %v873 = vsel %vm857, %v758, 0.0
        %v874 = vsel %vm858, %v759, 0.0
        %v875 = vsel %vm859, %v760, 0.0
        %v876 = vsel %vm860, %v761, 0.0
        %v877 = vsel %vm861, %v762, 0.0
        %v878 = vsel %vm862, %v763, 0.0
        %v879 = vsel %vm863, %v764, 0.0
        %v880 = vsel %vm864, %v765, 0.0
        %v881 = vsel %vm865, %v766, 0.0
        %v882 = vsel %vm866, %v767, 0.0
        %v883 = vsel %vm867, %v768, 0.0
        %v884 = vsel %vm868, %v769, 0.0
        %v885 = vsel %vm869, %v770, 0.0
        %v886 = vsel %vm870, %v771, 0.0
        %v887 = vsel %vm855, %v772, 0.0
        %v888 = vsel %vm856, %v773, 0.0
        %v889 = vsel %vm857, %v774, 0.0
        %v890 = vsel %vm858, %v775, 0.0
        %v891 = vsel %vm859, %v776, 0.0
        %v892 = vsel %vm860, %v777, 0.0
        %v893 = vsel %vm861, %v778, 0.0
        %v894 = vsel %vm862, %v779, 0.0
        %v895 = vsel %vm863, %v780, 0.0
        %v896 = vsel %vm864, %v781, 0.0
        %v897 = vsel %vm865, %v782, 0.0
        %v898 = vsel %vm866, %v783, 0.0
        %v899 = vsel %vm867, %v784, 0.0
        %v900 = vsel %vm868, %v785, 0.0
        %v901 = vsel %vm869, %v786, 0.0
        %v902 = vsel %vm870, %v787, 0.0
        %v903 = vld [vmem:[#allocation2] sm:$0x3]
        %v904 = vadd.f32 %v871, %v872
        %v905 = vadd.f32 %v904, %v873
        %v906 = vadd.f32 %v905, %v874
        %v907 = vadd.f32 %v906, %v875
        %v908 = vadd.f32 %v907, %v876
        %v909 = vadd.f32 %v908, %v877
        %v910 = vadd.f32 %v909, %v878
        %v911 = vadd.f32 %v910, %v879
        %v912 = vadd.f32 %v911, %v880
        %v913 = vadd.f32 %v912, %v881
        %v914 = vadd.f32 %v913, %v882
        %v915 = vadd.f32 %v914, %v883
        %v916 = vadd.f32 %v915, %v884
        %v917 = vadd.f32 %v916, %v885
        %v918 = vadd.f32 %v917, %v886
        %v919 = vrot.slane %v918, 4
        %v920 = vadd.f32 %v918, %v919
        %v921 = vrot.slane %v920, 2
        %v922 = vadd.f32 %v920, %v921
        %v923 = vrot.slane %v922, 1
        %v924 = vadd.f32 %v922, %v923
        %v925 = vadd.f32 %v887, %v888
        %v926 = vadd.f32 %v925, %v889
        %v927 = vadd.f32 %v926, %v890
        %v928 = vadd.f32 %v927, %v891
        %v929 = vadd.f32 %v928, %v892
        %v930 = vadd.f32 %v929, %v893
        %v931 = vadd.f32 %v930, %v894
        %v932 = vadd.f32 %v931, %v895
        %v933 = vadd.f32 %v932, %v896
        %v934 = vadd.f32 %v933, %v897
        %v935 = vadd.f32 %v934, %v898
        %v936 = vadd.f32 %v935, %v899
        %v937 = vadd.f32 %v936, %v900
        %v938 = vadd.f32 %v937, %v901
        %v939 = vadd.f32 %v938, %v902
        %v940 = vrot.slane %v939, 4
        %v941 = vadd.f32 %v939, %v940
        %v942 = vrot.slane %v941, 2
        %v943 = vadd.f32 %v941, %v942
        %v944 = vrot.slane %v943, 1
        %v945 = vadd.f32 %v943, %v944
        %vm948 = vcmask 1041409
        %v949 = vsel %vm948, %v945, %v924
        %v951 = vadd.f32 %v903, %v949
        %952 = vst [vmem:[#allocation2] sm:$0x3] %v951
        %p953 = scmp.eq.s32.totalorder %s30, 1
        // Predicated region
        $region57: #{tpu_custom_call.1} parent=39 // pred_check
          %p954 = pneg %p953
        $region58: #{tpu_custom_call.1} parent=39 // pred_check_branch
          %956 = sbr.rel (%p954) target = $region60
        $region59: #{tpu_custom_call.1} parent=39 // pred_region
          %v957 = vld [vmem:[#allocation2] sm:$0x3]
          %v958 = vmul.f32 %v957, 0.00390625
          %v959 = vpack.c.bf16 %v958, %v958
          %v960 = vld [vmem:[%s340] sm:$0xf]
          %v961 = vld [vmem:[%s340 + $0x4] sm:$0xf]
          %v962 = vld [vmem:[%s340 + $0x8] sm:$0xf]
          %v963 = vld [vmem:[%s340 + $0xc] sm:$0xf]
          %v964 = vld [vmem:[%s340 + $0x10] sm:$0xf]
          %v965 = vld [vmem:[%s340 + $0x14] sm:$0xf]
          %v966 = vld [vmem:[%s340 + $0x18] sm:$0xf]
          %v967 = vld [vmem:[%s340 + $0x1c] sm:$0xf]
          %v968 = vld [vmem:[%s340 + $0x20] sm:$0xf]
          %v969 = vld [vmem:[%s340 + $0x24] sm:$0xf]
          %v970 = vld [vmem:[%s340 + $0x28] sm:$0xf]
          %v971 = vld [vmem:[%s340 + $0x2c] sm:$0xf]
          %v972 = vld [vmem:[%s340 + $0x30] sm:$0xf]
          %v973 = vld [vmem:[%s340 + $0x34] sm:$0xf]
          %v974 = vld [vmem:[%s340 + $0x38] sm:$0xf]
          %v975 = vld [vmem:[%s340 + $0x3c] sm:$0xf]
          %v976 = vld [vmem:[%s389] sm:$0x1]
          %v978 = vlaneseq
          %v979 = vshrl.u32 %v978, 7
          %v980 = vsub.s32 0, %v979
          %v981 = vrot.slane %v976, %v980
          %v999 = vunpack.c.l.b16 %v960
          %v1000 = vunpack.c.l.b16 %v961
          %v1001 = vunpack.c.l.b16 %v962
          %v1002 = vunpack.c.l.b16 %v963
          %v1003 = vunpack.c.l.b16 %v964
          %v1004 = vunpack.c.l.b16 %v965
          %v1005 = vunpack.c.l.b16 %v966
          %v1006 = vunpack.c.l.b16 %v967
          %v1007 = vunpack.c.l.b16 %v968
          %v1008 = vunpack.c.l.b16 %v969
          %v1009 = vunpack.c.l.b16 %v970
          %v1010 = vunpack.c.l.b16 %v971
          %v1011 = vunpack.c.l.b16 %v972
          %v1012 = vunpack.c.l.b16 %v973
          %v1013 = vunpack.c.l.b16 %v974
          %v1014 = vunpack.c.l.b16 %v975
          %v1015 = vpack.c.b16 %v1000, %v999
          %v1016 = vpack.c.b16 %v1002, %v1001
          %v1017 = vpack.c.b16 %v1004, %v1003
          %v1018 = vpack.c.b16 %v1006, %v1005
          %v1019 = vpack.c.b16 %v1008, %v1007
          %v1020 = vpack.c.b16 %v1010, %v1009
          %v1021 = vpack.c.b16 %v1012, %v1011
          %v1022 = vpack.c.b16 %v1014, %v1013
          %1031 = vmatprep.subr.bf16.mxu0 0
          %1032 = vmatpush1.bf16.msra.mxu0 %v1022
          %1033 = vmatprep.subr.bf16.mxu0 0
          %1034 = vmatpush1.bf16.msra.mxu0 %v1021
          %1035 = vmatprep.subr.bf16.mxu0 0
          %1036 = vmatpush1.bf16.msra.mxu0 %v1020
          %1037 = vmatprep.subr.bf16.mxu0 0
          %1038 = vmatpush1.bf16.msra.mxu0 %v1019
          %1039 = vmatprep.subr.bf16.mxu0 0
          %1040 = vmatpush1.bf16.msra.mxu0 %v1018
          %1041 = vmatprep.subr.bf16.mxu0 0
          %1042 = vmatpush1.bf16.msra.mxu0 %v1017
          %1043 = vmatprep.subr.bf16.mxu0 0
          %1044 = vmatpush1.bf16.msra.mxu0 %v1016
          %1045 = vmatprep.subr.bf16.mxu0 0
          %1046 = vmatpush1.bf16.msra.mxu0 %v1015
          %1047 = vmatprep.subr.bf16.mxu0 0
          %1048 = vmatpush2.bf16.msra.mxu0 0
          %1049 = vmatprep.subr.bf16.mxu0 0
          %1050 = vmatpush2.bf16.msra.mxu0 0
          %1051 = vmatprep.subr.bf16.mxu0 0
          %1052 = vmatpush2.bf16.msra.mxu0 0
          %1053 = vmatprep.subr.bf16.mxu0 0
          %1054 = vmatpush2.bf16.msra.mxu0 0
          %1055 = vmatprep.subr.bf16.mxu0 0
          %1056 = vmatpush2.bf16.msra.mxu0 0
          %1057 = vmatprep.subr.bf16.mxu0 0
          %1058 = vmatpush2.bf16.msra.mxu0 0
          %1059 = vmatprep.subr.bf16.mxu0 0
          %1060 = vmatpush2.bf16.msra.mxu0 0
          %1061 = vmatprep.subr.bf16.mxu0 0
          %1062 = vmatpush2.bf16.msra.mxu0 0
          %1063 = vmatprep.mubr.bf16.mxu0 0
          %1064 = vmatmul.mubr.bf16.gmra.mxu0 %v959
          %v1065 = vpop.f32.mrf.mxu0
          %v1066 = vadd.f32 %v981, %v1065
          %v1067 = vpop.f32.mrf.mxu0
          %v1068 = vpop.f32.mrf.mxu0
          %v1069 = vpop.f32.mrf.mxu0
          %1070 = vdwg.mxu0
          %v1071 = vmax.f32 %v1066, 0.0
          %v1072 = vand.u32 2147483647, %v1066
          %v1073 = vsub.f32 0.0, %v1072
          %v1074 = vmul.f32 %v1073, 1.442695
          %v1075 = vpow.pop %v1074
          %v1076 = vadd.f32 %v1075, 1.0
          %v1077 = vlog2.pop %v1076
          %v1078 = vmul.f32 %v1077, 0.6931472
          %v1079 = vadd.f32 %v1071, %v1078
          %v1080 = vlaneseq
          %v1081 = vand.u32 %v1080, 127
          %vm1082 = vcmp.lt.s32.totalorder %v1081, 32
          %v1083 = vadd.f32 %v1079, 1e-06
          %v1084 = vsel %vm1082, %v1066, %v1083
          %1085 = vst [vmem:[%s382] sm:$0x3] %v1084
        $region60: #{tpu_custom_call.1} parent=39 // pred_fallthru
          _
        %s1086 = sand.u32 %s177, 1
        %s1087 = scalar_lea.sflag [#allocation5], %s1086
        %s1088 = sand.u32 %s177, 1
        %s1089 = smul.addr %s1088, 2
        %s1090 = scalar_lea.vmem [#allocation9], %s1089
        // Predicated region
        $region61: #{tpu_custom_call.1} parent=39 // pred_check
          %p1091 = pneg %p187
        $region62: #{tpu_custom_call.1} parent=39 // pred_check_branch
          %1093 = sbr.rel (%p1091) target = $region64
        $region63: #{tpu_custom_call.1} parent=39 // pred_region
          %s1095 = ssub.s32 32, 32
          %1096 = vsyncadd %s1087, %s1095
          %s1097 = smul.addr %s29, 32
          %s1098 = scalar_lea.hbm %s5, %s1097
          %s1100 = sshll.u32 %s1090, 4
          %s1101 = int_to_ptr.vmem [resolvable:$true] %s1100
          %1103 = dma.vmem_to_hbm [thread:$0]  %s1101, 32, %s1098, %s1087
        $region64: #{tpu_custom_call.1} parent=39 // pred_fallthru
          _
      $region40: #{tpu_custom_call.1} parent=5 // pred_fallthru
        _
      %p1104 = scmp.le.s32.totalorder 2, %s20
      // Predicated region
      $region65: #{tpu_custom_call.1} parent=5 // pred_check
        %p1105 = pneg %p1104
      $region66: #{tpu_custom_call.1} parent=5 // pred_check_branch
        %1107 = sbr.rel (%p1105) target = $region68
      $region67: #{tpu_custom_call.1} parent=5 // pred_region
        %s1108 = ssub.s32 %s20, 2
        // Predicated region
        $region69: #{tpu_custom_call.1} parent=67 // pred_check
          %p1109 = pneg %p193
        $region70: #{tpu_custom_call.1} parent=67 // pred_check_branch
          %1111 = sbr.rel (%p1109) target = $region72
        $region71: #{tpu_custom_call.1} parent=67 // pred_region
          %s1112 = sand.u32 %s178, 1
          %s1113 = scalar_lea.sflag [#allocation5], %s1112
          %s1114 = sand.u32 %s178, 1
          %s1115 = smul.addr %s1114, 2
          %s1116 = scalar_lea.vmem [#allocation9], %s1115
          %1117 = dma.done %s1113, 32
        $region72: #{tpu_custom_call.1} parent=67 // pred_fallthru
          _
      $region68: #{tpu_custom_call.1} parent=5 // pred_fallthru
        _
    $region6: #{tpu_custom_call.1} parent=1 // loop_footer
      %s24 = sadd.s32 1, %s20
    $region7: #{tpu_custom_call.1} parent=1 // loop_footer_branch
      %19 = sbr.rel target = $region3
    $region8: #{tpu_custom_call.1} parent=1 // loop_exit
      _
    %1118 = vsyncpa [#allocation4], 1
    %s1119 = scalar_lea.sflag [#allocation4], 1
    %1120 = vsyncpa %s1119, 1
    %1121 = vsyncpa [#allocation7], 1
    %s1122 = scalar_lea.sflag [#allocation7], 1
    %1123 = vsyncpa %s1122, 1
    %1124 = vsyncpa [#allocation5], 1
    %s1125 = scalar_lea.sflag [#allocation5], 1
    %1126 = vsyncpa %s1125, 1

</llo_original>
